<compile_context>
chip_gen: v5e
topology: v5e:2x2
jax: 0.10.0
libtpu: 0.0.40
codegen_flags: <defaults>
</compile_context>

<pallas_src>
import functools

import jax
import jax.numpy as jnp
from jax.experimental import pallas as pl
from jax.experimental.pallas import tpu as pltpu

LEAKY_SLOPE = 0.01            # torch.nn.LeakyReLU default negative_slope
_MAX_ND = 512                 # largest N*D handled by the block-diagonal path
_ACT_VMEM_BUDGET = 28 << 20   # activation VMEM budget used to size the batch tile
_TB_CAP = 4096                # hard cap on rows per grid step


def _leaky_relu(x):
    return jnp.where(x > 0, x, LEAKY_SLOPE * x)


def _reference_forward(embeddings, w0, b0, w1, b1):
    """Pure-JAX forward mirroring the PyTorch module (eval mode)."""
    u_em = embeddings[:, 0:1, :]
    i_em = embeddings[:, 1:, :]
    ui0 = u_em * i_em
    mu0 = jnp.mean(i_em, axis=1, keepdims=True)
    adj0 = (i_em * mu0) @ w0.T + b0
    mu1 = jnp.mean(adj0, axis=1, keepdims=True)
    adj1 = (adj0 * mu1) @ w1.T + b1
    return _leaky_relu(ui0 + adj0 + adj1)


def _basemean_kernel(x_ref, w0t_ref, b0_ref, w1t_ref, b1_ref, out_ref, *,
                     n_items, em_dim):
    # x_ref   : [TB, S*D]   one batch per sublane row, features on the lanes
    # w*t_ref : [N*D, N*D]  block-diagonal diag(W^T, ..., W^T)
    # b*_ref  : [1, N*D]    bias tiled per item group
    # out_ref : [TB, N*D]
    D = em_dim
    N = n_items
    ND = N * D
    inv_n = 1.0 / N

    x = x_ref[...]                       # [TB, S*D]
    u = x[:, :D]                         # [TB, D]       user embedding
    items = x[:, D:D + ND]               # [TB, N*D]     all items, lane-dense

    # user embedding broadcast to every item's lane group
    u_exp = jnp.concatenate([u] * N, axis=-1) if N > 1 else u   # [TB, N*D]

    def group_mean(v):
        # mean over the N item groups (D lanes each), result broadcast back to
        # every group; cyclic lane rolls keep this on the XLU (no relayouts).
        tot = v
        if N & (N - 1) == 0:             # power of two: log2(N) roll+add steps
            shift = D
            while shift < ND:
                tot = tot + pltpu.roll(tot, shift, axis=1)
                shift *= 2
        else:
            for g in range(1, N):
                tot = tot + pltpu.roll(v, g * D, axis=1)
        return tot * inv_n

    ui0 = u_exp * items                                          # u_em * i_em

    mu0 = group_mean(items)
    adj0 = jnp.dot(items * mu0, w0t_ref[...],
                   preferred_element_type=jnp.float32) + b0_ref[...]

    mu1 = group_mean(adj0)
    adj1 = jnp.dot(adj0 * mu1, w1t_ref[...],
                   preferred_element_type=jnp.float32) + b1_ref[...]

    out = _leaky_relu(ui0 + adj0 + adj1)
    # dropout: inference-mode identity
    # TODO(synk): training-mode dropout not implemented.
    out_ref[...] = out.astype(out_ref.dtype)


def _is_multi_tensorcore():
    """Best-effort detection of chips with >1 TensorCore per device."""
    try:
        kind = jax.devices()[0].device_kind.lower()
    except Exception:
        return False
    return any(tag in kind for tag in ("v4", "v5p", "7x", "v7"))


def basemean_add_mp_1(embeddings, w0, b0, w1, b1):
    """embeddings: [B, S, D] (user at position 0, items at 1..S-1).
    w0/w1: [D, D] torch-Linear weights ([out, in]); b0/b1: [D].
    Returns [B, S-1, D]."""
    B, S, D = embeddings.shape
    if S < 2:
        raise ValueError("BaseMean_add_mp_1 needs at least one item (S >= 2).")
    N = S - 1
    ND, SD = N * D, S * D

    if ND > _MAX_ND:
        # TODO(synk): large N*em_dim would need a K-tiled matmul path instead
        # of the [N*D, N*D] block-diagonal weight; fall back to plain XLA.
        return _reference_forward(embeddings, w0, b0, w1, b1)

    # ---- batch tile: as large as the activation VMEM budget allows ----------
    # double-buffered in/out blocks + ~6 live [TB, N*D] f32 temporaries
    bytes_per_row = 4 * (2 * SD + 9 * ND) + 512
    tb_cap = int(min(_TB_CAP, max(8, _ACT_VMEM_BUDGET // bytes_per_row)))

    G = -(-B // tb_cap)
    if G == 1 and B >= 256 and _is_multi_tensorcore():
        G = 2                 # let both TensorCores work on mid-sized batches
    if G == 1:
        TB = B                # full-extent block: no alignment or padding needed
    else:
        TB = -(-B // G)
        TB = -(-TB // 8) * 8  # sublane-align so (TB, lanes) blocks are legal
    B_pad = TB * G

    emb = embeddings
    if B_pad != B:
        # Pads by < 8*G rows, and only when B > tile cap or the grid was split;
        # the common case (B <= tile cap) is completely copy-free.
        # TODO(synk): a masked ragged tail would remove this copy entirely.
        emb = jnp.concatenate(
            [emb, jnp.zeros((B_pad - B, S, D), emb.dtype)], axis=0)

    # Free views (no transpose, no slice copies): one batch row is
    # [ user | item_0 | ... | item_{N-1} ] along the lane axis.
    x2 = emb.reshape(B_pad, SD)

    # Block-diagonal weights diag(W^T, ..., W^T): each item's Linear stays
    # independent while the matmul is a single lane-dense MXU op.
    w0t_bd = jnp.kron(jnp.eye(N, dtype=w0.dtype), w0.T)      # [N*D, N*D]
    w1t_bd = jnp.kron(jnp.eye(N, dtype=w1.dtype), w1.T)      # [N*D, N*D]
    b0_t = jnp.tile(b0, N).reshape(1, ND)
    b1_t = jnp.tile(b1, N).reshape(1, ND)

    kernel = functools.partial(_basemean_kernel, n_items=N, em_dim=D)
    out2 = pl.pallas_call(
        kernel,
        out_shape=jax.ShapeDtypeStruct((B_pad, ND), embeddings.dtype),
        grid_spec=pltpu.PrefetchScalarGridSpec(
            num_scalar_prefetch=0,
            grid=(G,),
            in_specs=[
                pl.BlockSpec((TB, SD), lambda g: (g, 0)),
                pl.BlockSpec((ND, ND), lambda g: (0, 0)),
                pl.BlockSpec((1, ND), lambda g: (0, 0)),
                pl.BlockSpec((ND, ND), lambda g: (0, 0)),
                pl.BlockSpec((1, ND), lambda g: (0, 0)),
            ],
            out_specs=pl.BlockSpec((TB, ND), lambda g: (g, 0)),
        ),
        compiler_params=pltpu.CompilerParams(
            dimension_semantics=("parallel",),
            vmem_limit_bytes=48 * 1024 * 1024,
        ),
    )(x2, w0t_bd, b0_t, w1t_bd, b1_t)

    out = out2.reshape(B_pad, N, D)     # free view back to [B, N, D]
    return out if B_pad == B else out[:B]


if __name__ == "__main__":
    # Small shapes: batch=2, seq=9 (1 user + 8 items), em_dim=32
    B, S, D = 2, 9, 32
    key = jax.random.PRNGKey(0)
    k_emb, k_w0, k_b0, k_w1, k_b1 = jax.random.split(key, 5)

    embeddings = jax.random.normal(k_emb, (B, S, D), dtype=jnp.float32)
    bound = 1.0 / (D ** 0.5)
    w0 = jax.random.uniform(k_w0, (D, D), jnp.float32, -bound, bound)
    b0 = jax.random.uniform(k_b0, (D,), jnp.float32, -bound, bound)
    w1 = jax.random.uniform(k_w1, (D, D), jnp.float32, -bound, bound)
    b1 = jax.random.uniform(k_b1, (D,), jnp.float32, -bound, bound)

    out = basemean_add_mp_1(embeddings, w0, b0, w1, b1)
    out = jax.block_until_ready(out)

    ref = _reference_forward(embeddings, w0, b0, w1, b1)
    assert out.shape == (B, S - 1, D), out.shape
    err = float(jnp.max(jnp.abs(out - ref)))
    assert jnp.allclose(out, ref, atol=1e-5, rtol=1e-5), err

    print("KERNEL_OK")
</pallas_src>

<mosaic_0001>
module attributes {stable_mosaic.version = 11 : i64} {
  func.func @_basemean_kernel(%arg0: i32, %arg1: memref<2x288xf32, #tpu.memory_space<vmem>>, %arg2: memref<256x256xf32, #tpu.memory_space<vmem>>, %arg3: memref<1x256xf32, #tpu.memory_space<vmem>>, %arg4: memref<256x256xf32, #tpu.memory_space<vmem>>, %arg5: memref<1x256xf32, #tpu.memory_space<vmem>>, %arg6: memref<2x256xf32, #tpu.memory_space<vmem>>) attributes {dimension_semantics = [#tpu.dimension_semantics<parallel>], iteration_bounds = array<i64: 1>, scalar_prefetch = 0 : i64, scratch_operands = 0 : i64, tpu.core_type = #tpu.core_type<tc>, window_params = [{transform_indices = @transform_0, window_bounds = array<i64: 2, 288>}, {pipeline_mode = #tpu.pipeline_mode<synchronous>, transform_indices = @transform_1, window_bounds = array<i64: 256, 256>}, {pipeline_mode = #tpu.pipeline_mode<synchronous>, transform_indices = @transform_2, window_bounds = array<i64: 1, 256>}, {pipeline_mode = #tpu.pipeline_mode<synchronous>, transform_indices = @transform_3, window_bounds = array<i64: 256, 256>}, {pipeline_mode = #tpu.pipeline_mode<synchronous>, transform_indices = @transform_4, window_bounds = array<i64: 1, 256>}, {transform_indices = @transform_5, window_bounds = array<i64: 2, 256>}]} {
    %c0 = arith.constant 0 : index
    %c0_0 = arith.constant 0 : index
    %0 = vector.load %arg1[%c0, %c0_0] : memref<2x288xf32, #tpu.memory_space<vmem>>, vector<2x288xf32>
    %1 = vector.extract_strided_slice %0 {offsets = [0, 0], sizes = [2, 32], strides = [1, 1]} : vector<2x288xf32> to vector<2x32xf32>
    %2 = vector.extract_strided_slice %0 {offsets = [0, 32], sizes = [2, 256], strides = [1, 1]} : vector<2x288xf32> to vector<2x256xf32>
    %3 = tpu.concatenate %1, %1, %1, %1, %1, %1, %1, %1 in 1 : vector<2x32xf32>, vector<2x32xf32>, vector<2x32xf32>, vector<2x32xf32>, vector<2x32xf32>, vector<2x32xf32>, vector<2x32xf32>, vector<2x32xf32> -> vector<2x256xf32>
    %4 = arith.mulf %3, %2 : vector<2x256xf32>
    %c32_i32 = arith.constant 32 : i32
    %5 = tpu.dynamic_rotate %2 by %c32_i32 dim 1 : vector<2x256xf32>, i32 -> vector<2x256xf32>
    %6 = arith.addf %2, %5 : vector<2x256xf32>
    %c64_i32 = arith.constant 64 : i32
    %7 = tpu.dynamic_rotate %6 by %c64_i32 dim 1 : vector<2x256xf32>, i32 -> vector<2x256xf32>
    %8 = arith.addf %6, %7 : vector<2x256xf32>
    %c128_i32 = arith.constant 128 : i32
    %9 = tpu.dynamic_rotate %8 by %c128_i32 dim 1 : vector<2x256xf32>, i32 -> vector<2x256xf32>
    %10 = arith.addf %8, %9 : vector<2x256xf32>
    %cst = arith.constant 1.250000e-01 : f32
    %11 = vector.broadcast %cst : f32 to vector<2x256xf32>
    %12 = arith.mulf %10, %11 : vector<2x256xf32>
    %13 = arith.mulf %2, %12 : vector<2x256xf32>
    %c0_1 = arith.constant 0 : index
    %c0_2 = arith.constant 0 : index
    %14 = vector.load %arg2[%c0_1, %c0_2] : memref<256x256xf32, #tpu.memory_space<vmem>>, vector<256x256xf32>
    %cst_3 = arith.constant dense<0.000000e+00> : vector<2x256xf32>
    %15 = tpu.matmul %13, %14, %cst_3 {dimension_numbers = #tpu.dot_dimension_numbers<[1], [0], [0], [1], [0, 0, 1, 1], [], []>} : vector<2x256xf32>, vector<256x256xf32>, vector<2x256xf32> -> vector<2x256xf32>
    %c0_4 = arith.constant 0 : index
    %c0_5 = arith.constant 0 : index
    %16 = vector.load %arg3[%c0_4, %c0_5] : memref<1x256xf32, #tpu.memory_space<vmem>>, vector<1x256xf32>
    %17 = vector.broadcast %16 : vector<1x256xf32> to vector<2x256xf32>
    %18 = arith.addf %15, %17 : vector<2x256xf32>
    %c32_i32_6 = arith.constant 32 : i32
    %19 = tpu.dynamic_rotate %18 by %c32_i32_6 dim 1 : vector<2x256xf32>, i32 -> vector<2x256xf32>
    %20 = arith.addf %18, %19 : vector<2x256xf32>
    %c64_i32_7 = arith.constant 64 : i32
    %21 = tpu.dynamic_rotate %20 by %c64_i32_7 dim 1 : vector<2x256xf32>, i32 -> vector<2x256xf32>
    %22 = arith.addf %20, %21 : vector<2x256xf32>
    %c128_i32_8 = arith.constant 128 : i32
    %23 = tpu.dynamic_rotate %22 by %c128_i32_8 dim 1 : vector<2x256xf32>, i32 -> vector<2x256xf32>
    %24 = arith.addf %22, %23 : vector<2x256xf32>
    %cst_9 = arith.constant 1.250000e-01 : f32
    %25 = vector.broadcast %cst_9 : f32 to vector<2x256xf32>
    %26 = arith.mulf %24, %25 : vector<2x256xf32>
    %27 = arith.mulf %18, %26 : vector<2x256xf32>
    %c0_10 = arith.constant 0 : index
    %c0_11 = arith.constant 0 : index
    %28 = vector.load %arg4[%c0_10, %c0_11] : memref<256x256xf32, #tpu.memory_space<vmem>>, vector<256x256xf32>
    %cst_12 = arith.constant dense<0.000000e+00> : vector<2x256xf32>
    %29 = tpu.matmul %27, %28, %cst_12 {dimension_numbers = #tpu.dot_dimension_numbers<[1], [0], [0], [1], [0, 0, 1, 1], [], []>} : vector<2x256xf32>, vector<256x256xf32>, vector<2x256xf32> -> vector<2x256xf32>
    %c0_13 = arith.constant 0 : index
    %c0_14 = arith.constant 0 : index
    %30 = vector.load %arg5[%c0_13, %c0_14] : memref<1x256xf32, #tpu.memory_space<vmem>>, vector<1x256xf32>
    %31 = vector.broadcast %30 : vector<1x256xf32> to vector<2x256xf32>
    %32 = arith.addf %29, %31 : vector<2x256xf32>
    %33 = arith.addf %4, %18 : vector<2x256xf32>
    %34 = arith.addf %33, %32 : vector<2x256xf32>
    %cst_15 = arith.constant 0.000000e+00 : f32
    %35 = vector.broadcast %cst_15 : f32 to vector<2x256xf32>
    %36 = arith.cmpf ogt, %34, %35 : vector<2x256xf32>
    %cst_16 = arith.constant 0.00999999977 : f32
    %37 = vector.broadcast %cst_16 : f32 to vector<2x256xf32>
    %38 = arith.mulf %37, %34 : vector<2x256xf32>
    %39 = arith.select %36, %34, %38 : vector<2x256xi1>, vector<2x256xf32>
    %c0_17 = arith.constant 0 : index
    %c0_18 = arith.constant 0 : index
    %40 = vector.load %arg6[%c0_17, %c0_18] : memref<2x256xf32, #tpu.memory_space<vmem>>, vector<2x256xf32>
    tpu.vector_store %arg6[%c0_17, %c0_18], %39 {strides = array<i32>} : memref<2x256xf32, #tpu.memory_space<vmem>>, vector<2x256xf32>,
    return
  }
  func.func @transform_0(%arg0: i32) -> (i32, i32) {
    %c0_i32 = arith.constant 0 : i32
    %c0_i32_0 = arith.constant 0 : i32
    return %arg0, %c0_i32 : i32, i32
  }
  func.func @transform_1(%arg0: i32) -> (i32, i32) {
    %c0_i32 = arith.constant 0 : i32
    %c0_i32_0 = arith.constant 0 : i32
    %c0_i32_1 = arith.constant 0 : i32
    return %c0_i32, %c0_i32_0 : i32, i32
  }
  func.func @transform_2(%arg0: i32) -> (i32, i32) {
    %c0_i32 = arith.constant 0 : i32
    %c0_i32_0 = arith.constant 0 : i32
    %c0_i32_1 = arith.constant 0 : i32
    return %c0_i32, %c0_i32_0 : i32, i32
  }
  func.func @transform_3(%arg0: i32) -> (i32, i32) {
    %c0_i32 = arith.constant 0 : i32
    %c0_i32_0 = arith.constant 0 : i32
    %c0_i32_1 = arith.constant 0 : i32
    return %c0_i32, %c0_i32_0 : i32, i32
  }
  func.func @transform_4(%arg0: i32) -> (i32, i32) {
    %c0_i32 = arith.constant 0 : i32
    %c0_i32_0 = arith.constant 0 : i32
    %c0_i32_1 = arith.constant 0 : i32
    return %c0_i32, %c0_i32_0 : i32, i32
  }
  func.func @transform_5(%arg0: i32) -> (i32, i32) {
    %c0_i32 = arith.constant 0 : i32
    %c0_i32_0 = arith.constant 0 : i32
    return %arg0, %c0_i32 : i32, i32
  }
}

</mosaic_0001>

<llo_original>
// kernel: tpu_custom_call.1
$region0: #{tpu_custom_call.1}
  #allocation0 [shape = 'u32[]', space=smem, size = 0x4, offset = 0x4, fixed_abs, tag = 'smem constant byte address 0x4 - core index']
  #allocation1 [shape = 'u32[72,128]{1,0:T(1,128)}', space=vmem, size = 0x9000, scoped, tag = 'internal scratch']
  %s0 = inlined_call_operand.hbm [shape: f32[2,288], index: 0, kind: input, shape index: {}]
  %s1 = inlined_call_operand.hbm [shape: f32[256,256], index: 1, kind: input, shape index: {}]
  %s2 = inlined_call_operand.hbm [shape: f32[1,256], index: 2, kind: input, shape index: {}]
  %s3 = inlined_call_operand.hbm [shape: f32[256,256], index: 3, kind: input, shape index: {}]
  %s4 = inlined_call_operand.vmem [shape: f32[1,256], index: 4, kind: input, shape index: {}]
  %s5 = inlined_call_operand.hbm [shape: f32[2,256], index: 5, kind: output, shape index: {}]
  %s6 = sld [smem:[#allocation0]]
  $region46: #{tpu_custom_call.1} parent=0
    _
  %s8 = ssub.s32 1, %s6
  %s9 = scalar_select 0, %s8, %s6
  $region1: #{tpu_custom_call.1} parent=0
    #allocation2 [shape = 'u8[3072]{0}', space=vmem, size = 0xc00, scoped, tag = 'input window, operand 0, single buffered']
    #allocation3 [shape = 's32[1]{0}', space=sflag, size = 0x4, scoped, tag = 'scoped memory for tpu_custom_call.1']
    #allocation4 [shape = 's32[1]{0}', space=sflag, size = 0x4, scoped, tag = 'scoped memory for tpu_custom_call.1']
    #allocation5 [shape = 'u8[262144]{0}', space=vmem, size = 0x40000, scoped, tag = 'input window, operand 1, single buffered']
    #allocation6 [shape = 's32[1]{0}', space=sflag, size = 0x4, scoped, tag = 'scoped memory for tpu_custom_call.1']
    #allocation7 [shape = 'u8[1024]{0}', space=vmem, size = 0x400, scoped, tag = 'input window, operand 2, single buffered']
    #allocation8 [shape = 'u8[262144]{0}', space=vmem, size = 0x40000, scoped, tag = 'input window, operand 3, single buffered']
    #allocation9 [shape = 's32[1]{0}', space=sflag, size = 0x4, scoped, tag = 'scoped memory for tpu_custom_call.1']
    #allocation10 [shape = 'u8[2048]{0}', space=vmem, size = 0x800, scoped, tag = 'output window, operand 0, single buffered']
    %10 = vsyncpa [#allocation3], 0
    %11 = vsyncpa [#allocation6], 0
    %12 = vsyncpa [#allocation9], 0
    %13 = vsyncpa [#allocation4], 0
    // Predicated region
    $region2: #{tpu_custom_call.1} parent=1 // pred_check
      _
    $region3: #{tpu_custom_call.1} parent=1 // pred_check_branch
      %15 = sbr.rel (0) target = $region5
    $region4: #{tpu_custom_call.1} parent=1 // pred_region
      %17 = vsyncadd [#allocation3], 0
      %s19 = sshll.u32 %s0, 4
      %s20 = int_to_ptr.hbm [resolvable:$true] %s19
      %s21 = sshll.u32 [#allocation2], 4
      %s22 = int_to_ptr.vmem [resolvable:$true] %s21
      %24 = dma.hbm_to_vmem [thread:$0]  %s20, 96, %s22, [#allocation3]
    $region5: #{tpu_custom_call.1} parent=1 // pred_fallthru
      _
    // Predicated region
    $region6: #{tpu_custom_call.1} parent=1 // pred_check
      _
    $region7: #{tpu_custom_call.1} parent=1 // pred_check_branch
      %26 = sbr.rel (0) target = $region9
    $region8: #{tpu_custom_call.1} parent=1 // pred_region
      %28 = vsyncadd [#allocation6], 0
      %s29 = sshll.u32 %s1, 4
      %s30 = int_to_ptr.hbm [resolvable:$true] %s29
      %s31 = sshll.u32 [#allocation5], 4
      %s32 = int_to_ptr.vmem [resolvable:$true] %s31
      %37 = dma.hbm_to_vmem [thread:$0]  %s30, 8192, %s32, [#allocation6], 256, 256, 16
    $region9: #{tpu_custom_call.1} parent=1 // pred_fallthru
      _
    // Predicated region
    $region10: #{tpu_custom_call.1} parent=1 // pred_check
      _
    $region11: #{tpu_custom_call.1} parent=1 // pred_check_branch
      %39 = sbr.rel (0) target = $region13
    $region12: #{tpu_custom_call.1} parent=1 // pred_region
      %41 = vsyncadd [#allocation6], 0
      %s43 = sshll.u32 %s2, 4
      %s44 = int_to_ptr.hbm [resolvable:$true] %s43
      %s45 = sshll.u32 [#allocation7], 4
      %s46 = int_to_ptr.vmem [resolvable:$true] %s45
      %48 = dma.hbm_to_vmem [thread:$0]  %s44, 32, %s46, [#allocation6]
    $region13: #{tpu_custom_call.1} parent=1 // pred_fallthru
      _
    // Predicated region
    $region14: #{tpu_custom_call.1} parent=1 // pred_check
      _
    $region15: #{tpu_custom_call.1} parent=1 // pred_check_branch
      %50 = sbr.rel (0) target = $region17
    $region16: #{tpu_custom_call.1} parent=1 // pred_region
      %52 = vsyncadd [#allocation9], 0
      %s53 = sshll.u32 %s3, 4
      %s54 = int_to_ptr.hbm [resolvable:$true] %s53
      %s55 = sshll.u32 [#allocation8], 4
      %s56 = int_to_ptr.vmem [resolvable:$true] %s55
      %61 = dma.hbm_to_vmem [thread:$0]  %s54, 8192, %s56, [#allocation9], 256, 256, 16
    $region17: #{tpu_custom_call.1} parent=1 // pred_fallthru
      _
    // Predicated region
    $region18: #{tpu_custom_call.1} parent=1 // pred_check
      _
    $region19: #{tpu_custom_call.1} parent=1 // pred_check_branch
      %63 = sbr.rel (0) target = $region21
    $region20: #{tpu_custom_call.1} parent=1 // pred_region
      _
    $region21: #{tpu_custom_call.1} parent=1 // pred_fallthru
      _
    // Predicated region
    $region22: #{tpu_custom_call.1} parent=1 // pred_check
      _
    $region23: #{tpu_custom_call.1} parent=1 // pred_check_branch
      %65 = sbr.rel (0) target = $region25
    $region24: #{tpu_custom_call.1} parent=1 // pred_region
      %67 = dma.done [#allocation3], 96
    $region25: #{tpu_custom_call.1} parent=1 // pred_fallthru
      _
    // Predicated region
    $region26: #{tpu_custom_call.1} parent=1 // pred_check
      _
    $region27: #{tpu_custom_call.1} parent=1 // pred_check_branch
      %69 = sbr.rel (0) target = $region29
    $region28: #{tpu_custom_call.1} parent=1 // pred_region
      %71 = dma.done [#allocation6], 8192
    $region29: #{tpu_custom_call.1} parent=1 // pred_fallthru
      _
    // Predicated region
    $region30: #{tpu_custom_call.1} parent=1 // pred_check
      _
    $region31: #{tpu_custom_call.1} parent=1 // pred_check_branch
      %73 = sbr.rel (0) target = $region33
    $region32: #{tpu_custom_call.1} parent=1 // pred_region
      %75 = dma.done [#allocation6], 32
    $region33: #{tpu_custom_call.1} parent=1 // pred_fallthru
      _
    // Predicated region
    $region34: #{tpu_custom_call.1} parent=1 // pred_check
      _
    $region35: #{tpu_custom_call.1} parent=1 // pred_check_branch
      %77 = sbr.rel (0) target = $region37
    $region36: #{tpu_custom_call.1} parent=1 // pred_region
      %79 = dma.done [#allocation9], 8192
    $region37: #{tpu_custom_call.1} parent=1 // pred_fallthru
      _
    %v80 = vld [vmem:[#allocation2] sm:$0x3f]
    %82 = vst [vmem:[#allocation1] ss:$4 sm:$0xff] %v80
    %v83 = vld.sshfl [vmem:[#allocation1] sm:$0xff pattern:$0x73625140]
    %84 = vrot.lane.b32.xlu0 %v83, 32
    %v85 = vpop.permute.xlu0 %84
    %87 = vst [vmem:[#allocation1] ss:$4 sm:$0xff] %v80
    %v88 = vld.sshfl [vmem:[#allocation1] sm:$0xff pattern:$0x73625140]
    %89 = vrot.lane.b32.xlu0 %v88, 64
    %v90 = vpop.permute.xlu0 %89
    %92 = vst [vmem:[#allocation1] ss:$4 sm:$0xff] %v80
    %v93 = vld.sshfl [vmem:[#allocation1] sm:$0xff pattern:$0x73625140]
    %94 = vrot.lane.b32.xlu0 %v93, 96
    %v95 = vpop.permute.xlu0 %94
    %97 = vst [vmem:[#allocation1] ss:$4 sm:$0xff] %v80
    %v98 = vld.sshfl [vmem:[#allocation1] sm:$0xff pattern:$0x73625140]
    %99 = vrot.lane.b32.xlu0 %v98, 32
    %v100 = vpop.permute.xlu0 %99
    %102 = vst [vmem:[#allocation1] ss:$4 sm:$0xff] %v80
    %v103 = vld.sshfl [vmem:[#allocation1] sm:$0xff pattern:$0x73625140]
    %104 = vrot.lane.b32.xlu0 %v103, 64
    %v105 = vpop.permute.xlu0 %104
    %107 = vst [vmem:[#allocation1] ss:$4 sm:$0xff] %v80
    %v108 = vld.sshfl [vmem:[#allocation1] sm:$0xff pattern:$0x73625140]
    %109 = vrot.lane.b32.xlu0 %v108, 96
    %v110 = vpop.permute.xlu0 %109
    %vm112 = vcmask 261120
    %v113 = vsel %vm112, %v80, %v85
    %vm114 = vcmask 523264
    %v115 = vsel %vm114, %v113, %v90
    %vm116 = vcmask 785408
    %v117 = vsel %vm116, %v115, %v95
    %v118 = vsel %vm112, %v80, %v100
    %v119 = vsel %vm114, %v118, %v105
    %v120 = vsel %vm116, %v119, %v110
    %121 = vst [vmem:[#allocation1] ss:$4 sm:$0xff] %v80
    %v122 = vld.sshfl [vmem:[#allocation1] sm:$0xff pattern:$0x73625140]
    %v123 = vld.sshfl [vmem:[#allocation1 + $0x8] sm:$0xff pattern:$0x73625140]
    %v124 = vld.sshfl [vmem:[#allocation1 + $0x10] sm:$0xff pattern:$0x73625140]
    %125 = vrot.lane.b32.xlu0 %v122, 96
    %v126 = vpop.permute.xlu0 %125
    %127 = vrot.lane.b32.xlu0 %v123, 96
    %v128 = vpop.permute.xlu0 %127
    %129 = vrot.lane.b32.xlu0 %v124, 96
    %v130 = vpop.permute.xlu0 %129
    %v131 = vsel %vm116, %v126, %v128
    %v132 = vsel %vm116, %v128, %v130
    %v135 = vmul.f32 %v117, %v131
    %v136 = vmul.f32 %v120, %v132
    %137 = vst [vmem:[#allocation1] ss:$4 sm:$0xff] %v80
    %v138 = vld.sshfl [vmem:[#allocation1] sm:$0xff pattern:$0x73625140]
    %v139 = vld.sshfl [vmem:[#allocation1 + $0x8] sm:$0xff pattern:$0x73625140]
    %v140 = vld.sshfl [vmem:[#allocation1 + $0x10] sm:$0xff pattern:$0x73625140]
    %141 = vrot.lane.b32.xlu0 %v138, 96
    %v142 = vpop.permute.xlu0 %141
    %143 = vrot.lane.b32.xlu0 %v139, 96
    %v144 = vpop.permute.xlu0 %143
    %145 = vrot.lane.b32.xlu0 %v140, 96
    %v146 = vpop.permute.xlu0 %145
    %v147 = vsel %vm116, %v142, %v144
    %v148 = vsel %vm116, %v144, %v146
    %151 = vrot.lane.b32.xlu0 %v147, 32
    %v152 = vpop.permute.xlu0 %151
    %153 = vrot.lane.b32.xlu0 %v148, 32
    %v154 = vpop.permute.xlu0 %153
    %v155 = vlaneseq
    %v156 = vand.u32 %v155, 127
    %vm157 = vcmp.lt.s32.totalorder %v156, 32
    %v158 = vsel %vm157, %v152, %v154
    %v159 = vsel %vm157, %v154, %v152
    %v162 = vrot.slane %v158, 6
    %vm163 = vcmask 1041408
    %v164 = vsel %vm163, %v159, %v162
    %165 = vrot.lane.b32.xlu0 %v164, 32
    %v166 = vpop.permute.xlu0 %165
    %v167 = vrot.slane %v166, 6
    %v168 = vsel %vm112, %v167, %v166
    %v170 = vadd.f32 %v80, %v168
    %172 = vst [vmem:[#allocation1] ss:$4 sm:$0xff] %v170
    %v173 = vld.sshfl [vmem:[#allocation1] sm:$0xff pattern:$0x73625140]
    %v174 = vld.sshfl [vmem:[#allocation1 + $0x8] sm:$0xff pattern:$0x73625140]
    %v175 = vld.sshfl [vmem:[#allocation1 + $0x10] sm:$0xff pattern:$0x73625140]
    %176 = vrot.lane.b32.xlu0 %v173, 96
    %v177 = vpop.permute.xlu0 %176
    %178 = vrot.lane.b32.xlu0 %v174, 96
    %v179 = vpop.permute.xlu0 %178
    %180 = vrot.lane.b32.xlu0 %v175, 96
    %v181 = vpop.permute.xlu0 %180
    %v182 = vsel %vm116, %v177, %v179
    %v183 = vsel %vm116, %v179, %v181
    %186 = vrot.lane.b32.xlu0 %v182, 64
    %v187 = vpop.permute.xlu0 %186
    %188 = vrot.lane.b32.xlu0 %v183, 64
    %v189 = vpop.permute.xlu0 %188
    %vm190 = vcmp.lt.s32.totalorder %v156, 64
    %v191 = vsel %vm190, %v187, %v189
    %v192 = vsel %vm190, %v189, %v187
    %v195 = vrot.slane %v191, 6
    %v196 = vsel %vm163, %v192, %v195
    %197 = vrot.lane.b32.xlu0 %v196, 32
    %v198 = vpop.permute.xlu0 %197
    %v199 = vrot.slane %v198, 6
    %v200 = vsel %vm112, %v199, %v198
    %v202 = vadd.f32 %v170, %v200
    %204 = vst [vmem:[#allocation1] ss:$4 sm:$0xff] %v202
    %v205 = vld.sshfl [vmem:[#allocation1] sm:$0xff pattern:$0x73625140]
    %v206 = vld.sshfl [vmem:[#allocation1 + $0x8] sm:$0xff pattern:$0x73625140]
    %v207 = vld.sshfl [vmem:[#allocation1 + $0x10] sm:$0xff pattern:$0x73625140]
    %208 = vrot.lane.b32.xlu0 %v205, 96
    %v209 = vpop.permute.xlu0 %208
    %210 = vrot.lane.b32.xlu0 %v206, 96
    %v211 = vpop.permute.xlu0 %210
    %212 = vrot.lane.b32.xlu0 %v207, 96
    %v213 = vpop.permute.xlu0 %212
    %v214 = vsel %vm116, %v209, %v211
    %v215 = vsel %vm116, %v211, %v213
    %v216 = vrot.slane %v214, 6
    %v217 = vsel %vm163, %v215, %v216
    %218 = vrot.lane.b32.xlu0 %v217, 32
    %v219 = vpop.permute.xlu0 %218
    %v220 = vrot.slane %v219, 6
    %v221 = vsel %vm112, %v220, %v219
    %v223 = vadd.f32 %v202, %v221
    %v224 = vmul.f32 %v223, 0.125
    %v225 = vmul.f32 %v80, %v224
    %v226 = vld [vmem:[#allocation5] sm:$0xff]
    %v227 = vld [vmem:[#allocation5 + $0x8] sm:$0xff]
    %v228 = vld [vmem:[#allocation5 + $0x10] sm:$0xff]
    %v229 = vld [vmem:[#allocation5 + $0x18] sm:$0xff]
    %v230 = vld [vmem:[#allocation5 + $0x20] sm:$0xff]
    %v231 = vld [vmem:[#allocation5 + $0x28] sm:$0xff]
    %v232 = vld [vmem:[#allocation5 + $0x30] sm:$0xff]
    %v233 = vld [vmem:[#allocation5 + $0x38] sm:$0xff]
    %v234 = vld [vmem:[#allocation5 + $0x40] sm:$0xff]
    %v235 = vld [vmem:[#allocation5 + $0x48] sm:$0xff]
    %v236 = vld [vmem:[#allocation5 + $0x50] sm:$0xff]
    %v237 = vld [vmem:[#allocation5 + $0x58] sm:$0xff]
    %v238 = vld [vmem:[#allocation5 + $0x60] sm:$0xff]
    %v239 = vld [vmem:[#allocation5 + $0x68] sm:$0xff]
    %v240 = vld [vmem:[#allocation5 + $0x70] sm:$0xff]
    %v241 = vld [vmem:[#allocation5 + $0x78] sm:$0xff]
    %v242 = vld [vmem:[#allocation5 + $0x80] sm:$0xff]
    %v243 = vld [vmem:[#allocation5 + $0x88] sm:$0xff]
    %v244 = vld [vmem:[#allocation5 + $0x90] sm:$0xff]
    %v245 = vld [vmem:[#allocation5 + $0x98] sm:$0xff]
    %v246 = vld [vmem:[#allocation5 + $0xa0] sm:$0xff]
    %v247 = vld [vmem:[#allocation5 + $0xa8] sm:$0xff]
    %v248 = vld [vmem:[#allocation5 + $0xb0] sm:$0xff]
    %v249 = vld [vmem:[#allocation5 + $0xb8] sm:$0xff]
    %v250 = vld [vmem:[#allocation5 + $0xc0] sm:$0xff]
    %v251 = vld [vmem:[#allocation5 + $0xc8] sm:$0xff]
    %v252 = vld [vmem:[#allocation5 + $0xd0] sm:$0xff]
    %v253 = vld [vmem:[#allocation5 + $0xd8] sm:$0xff]
    %v254 = vld [vmem:[#allocation5 + $0xe0] sm:$0xff]
    %v255 = vld [vmem:[#allocation5 + $0xe8] sm:$0xff]
    %v256 = vld [vmem:[#allocation5 + $0xf0] sm:$0xff]
    %v257 = vld [vmem:[#allocation5 + $0xf8] sm:$0xff]
    %v258 = vld [vmem:[#allocation5 + $0x100] sm:$0xff]
    %v259 = vld [vmem:[#allocation5 + $0x108] sm:$0xff]
    %v260 = vld [vmem:[#allocation5 + $0x110] sm:$0xff]
    %v261 = vld [vmem:[#allocation5 + $0x118] sm:$0xff]
    %v262 = vld [vmem:[#allocation5 + $0x120] sm:$0xff]
    %v263 = vld [vmem:[#allocation5 + $0x128] sm:$0xff]
    %v264 = vld [vmem:[#allocation5 + $0x130] sm:$0xff]
    %v265 = vld [vmem:[#allocation5 + $0x138] sm:$0xff]
    %v266 = vld [vmem:[#allocation5 + $0x140] sm:$0xff]
    %v267 = vld [vmem:[#allocation5 + $0x148] sm:$0xff]
    %v268 = vld [vmem:[#allocation5 + $0x150] sm:$0xff]
    %v269 = vld [vmem:[#allocation5 + $0x158] sm:$0xff]
    %v270 = vld [vmem:[#allocation5 + $0x160] sm:$0xff]
    %v271 = vld [vmem:[#allocation5 + $0x168] sm:$0xff]
    %v272 = vld [vmem:[#allocation5 + $0x170] sm:$0xff]
    %v273 = vld [vmem:[#allocation5 + $0x178] sm:$0xff]
    %v274 = vld [vmem:[#allocation5 + $0x180] sm:$0xff]
    %v275 = vld [vmem:[#allocation5 + $0x188] sm:$0xff]
    %v276 = vld [vmem:[#allocation5 + $0x190] sm:$0xff]
    %v277 = vld [vmem:[#allocation5 + $0x198] sm:$0xff]
    %v278 = vld [vmem:[#allocation5 + $0x1a0] sm:$0xff]
    %v279 = vld [vmem:[#allocation5 + $0x1a8] sm:$0xff]
    %v280 = vld [vmem:[#allocation5 + $0x1b0] sm:$0xff]
    %v281 = vld [vmem:[#allocation5 + $0x1b8] sm:$0xff]
    %v282 = vld [vmem:[#allocation5 + $0x1c0] sm:$0xff]
    %v283 = vld [vmem:[#allocation5 + $0x1c8] sm:$0xff]
    %v284 = vld [vmem:[#allocation5 + $0x1d0] sm:$0xff]
    %v285 = vld [vmem:[#allocation5 + $0x1d8] sm:$0xff]
    %v286 = vld [vmem:[#allocation5 + $0x1e0] sm:$0xff]
    %v287 = vld [vmem:[#allocation5 + $0x1e8] sm:$0xff]
    %v288 = vld [vmem:[#allocation5 + $0x1f0] sm:$0xff]
    %v289 = vld [vmem:[#allocation5 + $0x1f8] sm:$0xff]
    %v290 = vld [vmem:[#allocation7] sm:$0x3]
    %v292 = vperm.slane %v290, 0
    %v293 = vperm.slane %v290, 1
    %297 = vst [vmem:[#allocation1] ss:$4 sm:$0xff] %v225
    %v298 = vld.sshfl [vmem:[#allocation1] sm:$0xff pattern:$0x73625140]
    %v299 = vld.sshfl [vmem:[#allocation1 + $0x8] sm:$0xff pattern:$0x73625140]
    %v300 = vld.sshfl [vmem:[#allocation1 + $0x10] sm:$0xff pattern:$0x73625140]
    %301 = vrot.lane.b32.xlu0 %v298, 96
    %v302 = vpop.permute.xlu0 %301
    %303 = vrot.lane.b32.xlu0 %v299, 96
    %v304 = vpop.permute.xlu0 %303
    %305 = vrot.lane.b32.xlu0 %v300, 96
    %v306 = vpop.permute.xlu0 %305
    %v307 = vsel %vm116, %v302, %v304
    %v308 = vsel %vm116, %v304, %v306
    %311 = vmatpush.msra.mxu0 %v256
    %312 = vmatpush.msra.mxu0 %v254
    %313 = vmatpush.msra.mxu0 %v252
    %314 = vmatpush.msra.mxu0 %v250
    %315 = vmatpush.msra.mxu0 %v248
    %316 = vmatpush.msra.mxu0 %v246
    %317 = vmatpush.msra.mxu0 %v244
    %318 = vmatpush.msra.mxu0 %v242
    %319 = vmatpush.msra.mxu0 %v240
    %320 = vmatpush.msra.mxu0 %v238
    %321 = vmatpush.msra.mxu0 %v236
    %322 = vmatpush.msra.mxu0 %v234
    %323 = vmatpush.msra.mxu0 %v232
    %324 = vmatpush.msra.mxu0 %v230
    %325 = vmatpush.msra.mxu0 %v228
    %326 = vmatpush.msra.mxu0 %v226
    %327 = vmatmul.f32.gmra.mxu0 %v307
    %v328 = vpop.f32.mrf.mxu0
    %v329 = vadd.f32 %v292, %v328
    %330 = vdwg.mxu0
    %331 = vmatpush.msra.mxu0 %v288
    %332 = vmatpush.msra.mxu0 %v286
    %333 = vmatpush.msra.mxu0 %v284
    %334 = vmatpush.msra.mxu0 %v282
    %335 = vmatpush.msra.mxu0 %v280
    %336 = vmatpush.msra.mxu0 %v278
    %337 = vmatpush.msra.mxu0 %v276
    %338 = vmatpush.msra.mxu0 %v274
    %339 = vmatpush.msra.mxu0 %v272
    %340 = vmatpush.msra.mxu0 %v270
    %341 = vmatpush.msra.mxu0 %v268
    %342 = vmatpush.msra.mxu0 %v266
    %343 = vmatpush.msra.mxu0 %v264
    %344 = vmatpush.msra.mxu0 %v262
    %345 = vmatpush.msra.mxu0 %v260
    %346 = vmatpush.msra.mxu0 %v258
    %347 = vmatmul.f32.gmra.mxu0 %v308
    %v348 = vpop.f32.mrf.mxu0
    %v349 = vadd.f32 %v329, %v348
    %350 = vdwg.mxu0
    %351 = vmatpush.msra.mxu0 %v257
    %352 = vmatpush.msra.mxu0 %v255
    %353 = vmatpush.msra.mxu0 %v253
    %354 = vmatpush.msra.mxu0 %v251
    %355 = vmatpush.msra.mxu0 %v249
    %356 = vmatpush.msra.mxu0 %v247
    %357 = vmatpush.msra.mxu0 %v245
    %358 = vmatpush.msra.mxu0 %v243
    %359 = vmatpush.msra.mxu0 %v241
    %360 = vmatpush.msra.mxu0 %v239
    %361 = vmatpush.msra.mxu0 %v237
    %362 = vmatpush.msra.mxu0 %v235
    %363 = vmatpush.msra.mxu0 %v233
    %364 = vmatpush.msra.mxu0 %v231
    %365 = vmatpush.msra.mxu0 %v229
    %366 = vmatpush.msra.mxu0 %v227
    %367 = vmatmul.f32.gmra.mxu0 %v307
    %v368 = vpop.f32.mrf.mxu0
    %v369 = vadd.f32 %v293, %v368
    %370 = vdwg.mxu0
    %371 = vmatpush.msra.mxu0 %v289
    %372 = vmatpush.msra.mxu0 %v287
    %373 = vmatpush.msra.mxu0 %v285
    %374 = vmatpush.msra.mxu0 %v283
    %375 = vmatpush.msra.mxu0 %v281
    %376 = vmatpush.msra.mxu0 %v279
    %377 = vmatpush.msra.mxu0 %v277
    %378 = vmatpush.msra.mxu0 %v275
    %379 = vmatpush.msra.mxu0 %v273
    %380 = vmatpush.msra.mxu0 %v271
    %381 = vmatpush.msra.mxu0 %v269
    %382 = vmatpush.msra.mxu0 %v267
    %383 = vmatpush.msra.mxu0 %v265
    %384 = vmatpush.msra.mxu0 %v263
    %385 = vmatpush.msra.mxu0 %v261
    %386 = vmatpush.msra.mxu0 %v259
    %387 = vmatmul.f32.gmra.mxu0 %v308
    %v388 = vpop.f32.mrf.mxu0
    %v389 = vadd.f32 %v369, %v388
    %390 = vdwg.mxu0
    %391 = vrot.lane.b32.xlu0 %v349, 32
    %v392 = vpop.permute.xlu0 %391
    %393 = vrot.lane.b32.xlu0 %v389, 32
    %v394 = vpop.permute.xlu0 %393
    %v395 = vsel %vm157, %v392, %v394
    %v396 = vsel %vm157, %v394, %v392
    %v397 = vadd.f32 %v349, %v396
    %v398 = vadd.f32 %v389, %v395
    %399 = vrot.lane.b32.xlu0 %v397, 64
    %v400 = vpop.permute.xlu0 %399
    %401 = vrot.lane.b32.xlu0 %v398, 64
    %v402 = vpop.permute.xlu0 %401
    %v403 = vsel %vm190, %v400, %v402
    %v404 = vsel %vm190, %v402, %v400
    %v405 = vadd.f32 %v397, %v404
    %v406 = vadd.f32 %v398, %v403
    %v407 = vadd.f32 %v405, %v406
    %v408 = vmul.f32 %v407, 0.125
    %v409 = vmul.f32 %v349, %v408
    %v410 = vmul.f32 %v389, %v408
    %v411 = vld [vmem:[#allocation8] sm:$0xff]
    %v412 = vld [vmem:[#allocation8 + $0x8] sm:$0xff]
    %v413 = vld [vmem:[#allocation8 + $0x10] sm:$0xff]
    %v414 = vld [vmem:[#allocation8 + $0x18] sm:$0xff]
    %v415 = vld [vmem:[#allocation8 + $0x20] sm:$0xff]
    %v416 = vld [vmem:[#allocation8 + $0x28] sm:$0xff]
    %v417 = vld [vmem:[#allocation8 + $0x30] sm:$0xff]
    %v418 = vld [vmem:[#allocation8 + $0x38] sm:$0xff]
    %v419 = vld [vmem:[#allocation8 + $0x40] sm:$0xff]
    %v420 = vld [vmem:[#allocation8 + $0x48] sm:$0xff]
    %v421 = vld [vmem:[#allocation8 + $0x50] sm:$0xff]
    %v422 = vld [vmem:[#allocation8 + $0x58] sm:$0xff]
    %v423 = vld [vmem:[#allocation8 + $0x60] sm:$0xff]
    %v424 = vld [vmem:[#allocation8 + $0x68] sm:$0xff]
    %v425 = vld [vmem:[#allocation8 + $0x70] sm:$0xff]
    %v426 = vld [vmem:[#allocation8 + $0x78] sm:$0xff]
    %v427 = vld [vmem:[#allocation8 + $0x80] sm:$0xff]
    %v428 = vld [vmem:[#allocation8 + $0x88] sm:$0xff]
    %v429 = vld [vmem:[#allocation8 + $0x90] sm:$0xff]
    %v430 = vld [vmem:[#allocation8 + $0x98] sm:$0xff]
    %v431 = vld [vmem:[#allocation8 + $0xa0] sm:$0xff]
    %v432 = vld [vmem:[#allocation8 + $0xa8] sm:$0xff]
    %v433 = vld [vmem:[#allocation8 + $0xb0] sm:$0xff]
    %v434 = vld [vmem:[#allocation8 + $0xb8] sm:$0xff]
    %v435 = vld [vmem:[#allocation8 + $0xc0] sm:$0xff]
    %v436 = vld [vmem:[#allocation8 + $0xc8] sm:$0xff]
    %v437 = vld [vmem:[#allocation8 + $0xd0] sm:$0xff]
    %v438 = vld [vmem:[#allocation8 + $0xd8] sm:$0xff]
    %v439 = vld [vmem:[#allocation8 + $0xe0] sm:$0xff]
    %v440 = vld [vmem:[#allocation8 + $0xe8] sm:$0xff]
    %v441 = vld [vmem:[#allocation8 + $0xf0] sm:$0xff]
    %v442 = vld [vmem:[#allocation8 + $0xf8] sm:$0xff]
    %v443 = vld [vmem:[#allocation8 + $0x100] sm:$0xff]
    %v444 = vld [vmem:[#allocation8 + $0x108] sm:$0xff]
    %v445 = vld [vmem:[#allocation8 + $0x110] sm:$0xff]
    %v446 = vld [vmem:[#allocation8 + $0x118] sm:$0xff]
    %v447 = vld [vmem:[#allocation8 + $0x120] sm:$0xff]
    %v448 = vld [vmem:[#allocation8 + $0x128] sm:$0xff]
    %v449 = vld [vmem:[#allocation8 + $0x130] sm:$0xff]
    %v450 = vld [vmem:[#allocation8 + $0x138] sm:$0xff]
    %v451 = vld [vmem:[#allocation8 + $0x140] sm:$0xff]
    %v452 = vld [vmem:[#allocation8 + $0x148] sm:$0xff]
    %v453 = vld [vmem:[#allocation8 + $0x150] sm:$0xff]
    %v454 = vld [vmem:[#allocation8 + $0x158] sm:$0xff]
    %v455 = vld [vmem:[#allocation8 + $0x160] sm:$0xff]
    %v456 = vld [vmem:[#allocation8 + $0x168] sm:$0xff]
    %v457 = vld [vmem:[#allocation8 + $0x170] sm:$0xff]
    %v458 = vld [vmem:[#allocation8 + $0x178] sm:$0xff]
    %v459 = vld [vmem:[#allocation8 + $0x180] sm:$0xff]
    %v460 = vld [vmem:[#allocation8 + $0x188] sm:$0xff]
    %v461 = vld [vmem:[#allocation8 + $0x190] sm:$0xff]
    %v462 = vld [vmem:[#allocation8 + $0x198] sm:$0xff]
    %v463 = vld [vmem:[#allocation8 + $0x1a0] sm:$0xff]
    %v464 = vld [vmem:[#allocation8 + $0x1a8] sm:$0xff]
    %v465 = vld [vmem:[#allocation8 + $0x1b0] sm:$0xff]
    %v466 = vld [vmem:[#allocation8 + $0x1b8] sm:$0xff]
    %v467 = vld [vmem:[#allocation8 + $0x1c0] sm:$0xff]
    %v468 = vld [vmem:[#allocation8 + $0x1c8] sm:$0xff]
    %v469 = vld [vmem:[#allocation8 + $0x1d0] sm:$0xff]
    %v470 = vld [vmem:[#allocation8 + $0x1d8] sm:$0xff]
    %v471 = vld [vmem:[#allocation8 + $0x1e0] sm:$0xff]
    %v472 = vld [vmem:[#allocation8 + $0x1e8] sm:$0xff]
    %v473 = vld [vmem:[#allocation8 + $0x1f0] sm:$0xff]
    %v474 = vld [vmem:[#allocation8 + $0x1f8] sm:$0xff]
    %v475 = vld [vmem:[%s4] sm:$0x3]
    %v477 = vperm.slane %v475, 0
    %v478 = vperm.slane %v475, 1
    %481 = vmatpush.msra.mxu0 %v441
    %482 = vmatpush.msra.mxu0 %v439
    %483 = vmatpush.msra.mxu0 %v437
    %484 = vmatpush.msra.mxu0 %v435
    %485 = vmatpush.msra.mxu0 %v433
    %486 = vmatpush.msra.mxu0 %v431
    %487 = vmatpush.msra.mxu0 %v429
    %488 = vmatpush.msra.mxu0 %v427
    %489 = vmatpush.msra.mxu0 %v425
    %490 = vmatpush.msra.mxu0 %v423
    %491 = vmatpush.msra.mxu0 %v421
    %492 = vmatpush.msra.mxu0 %v419
    %493 = vmatpush.msra.mxu0 %v417
    %494 = vmatpush.msra.mxu0 %v415
    %495 = vmatpush.msra.mxu0 %v413
    %496 = vmatpush.msra.mxu0 %v411
    %497 = vmatmul.f32.gmra.mxu0 %v409
    %v498 = vpop.f32.mrf.mxu0
    %v499 = vadd.f32 %v477, %v498
    %500 = vdwg.mxu0
    %501 = vmatpush.msra.mxu0 %v473
    %502 = vmatpush.msra.mxu0 %v471
    %503 = vmatpush.msra.mxu0 %v469
    %504 = vmatpush.msra.mxu0 %v467
    %505 = vmatpush.msra.mxu0 %v465
    %506 = vmatpush.msra.mxu0 %v463
    %507 = vmatpush.msra.mxu0 %v461
    %508 = vmatpush.msra.mxu0 %v459
    %509 = vmatpush.msra.mxu0 %v457
    %510 = vmatpush.msra.mxu0 %v455
    %511 = vmatpush.msra.mxu0 %v453
    %512 = vmatpush.msra.mxu0 %v451
    %513 = vmatpush.msra.mxu0 %v449
    %514 = vmatpush.msra.mxu0 %v447
    %515 = vmatpush.msra.mxu0 %v445
    %516 = vmatpush.msra.mxu0 %v443
    %517 = vmatmul.f32.gmra.mxu0 %v410
    %v518 = vpop.f32.mrf.mxu0
    %v519 = vadd.f32 %v499, %v518
    %520 = vdwg.mxu0
    %521 = vmatpush.msra.mxu0 %v442
    %522 = vmatpush.msra.mxu0 %v440
    %523 = vmatpush.msra.mxu0 %v438
    %524 = vmatpush.msra.mxu0 %v436
    %525 = vmatpush.msra.mxu0 %v434
    %526 = vmatpush.msra.mxu0 %v432
    %527 = vmatpush.msra.mxu0 %v430
    %528 = vmatpush.msra.mxu0 %v428
    %529 = vmatpush.msra.mxu0 %v426
    %530 = vmatpush.msra.mxu0 %v424
    %531 = vmatpush.msra.mxu0 %v422
    %532 = vmatpush.msra.mxu0 %v420
    %533 = vmatpush.msra.mxu0 %v418
    %534 = vmatpush.msra.mxu0 %v416
    %535 = vmatpush.msra.mxu0 %v414
    %536 = vmatpush.msra.mxu0 %v412
    %537 = vmatmul.f32.gmra.mxu0 %v409
    %v538 = vpop.f32.mrf.mxu0
    %v539 = vadd.f32 %v478, %v538
    %540 = vdwg.mxu0
    %541 = vmatpush.msra.mxu0 %v474
    %542 = vmatpush.msra.mxu0 %v472
    %543 = vmatpush.msra.mxu0 %v470
    %544 = vmatpush.msra.mxu0 %v468
    %545 = vmatpush.msra.mxu0 %v466
    %546 = vmatpush.msra.mxu0 %v464
    %547 = vmatpush.msra.mxu0 %v462
    %548 = vmatpush.msra.mxu0 %v460
    %549 = vmatpush.msra.mxu0 %v458
    %550 = vmatpush.msra.mxu0 %v456
    %551 = vmatpush.msra.mxu0 %v454
    %552 = vmatpush.msra.mxu0 %v452
    %553 = vmatpush.msra.mxu0 %v450
    %554 = vmatpush.msra.mxu0 %v448
    %555 = vmatpush.msra.mxu0 %v446
    %556 = vmatpush.msra.mxu0 %v444
    %557 = vmatmul.f32.gmra.mxu0 %v410
    %v558 = vpop.f32.mrf.mxu0
    %v559 = vadd.f32 %v539, %v558
    %560 = vdwg.mxu0
    %v561 = vadd.f32 %v135, %v349
    %v562 = vadd.f32 %v136, %v389
    %v563 = vadd.f32 %v561, %v519
    %v564 = vadd.f32 %v562, %v559
    %vm565 = vcmp.gt.f32.partialorder %v563, 0.0
    %vm566 = vcmp.gt.f32.partialorder %v564, 0.0
    %v567 = vmul.f32 %v563, 0.01
    %v568 = vmul.f32 %v564, 0.01
    %v569 = vsel %vm565, %v563, %v567
    %v570 = vsel %vm566, %v564, %v568
    %v573 = vrot.slane %v570, 6
    %v574 = vsel %vm163, %v569, %v573
    %576 = vst [vmem:[#allocation10] sm:$0xf] %v574
    // Predicated region
    $region38: #{tpu_custom_call.1} parent=1 // pred_check
      _
    $region39: #{tpu_custom_call.1} parent=1 // pred_check_branch
      %578 = sbr.rel (0) target = $region41
    $region40: #{tpu_custom_call.1} parent=1 // pred_region
      %580 = vsyncadd [#allocation4], 0
      %s582 = sshll.u32 [#allocation10], 4
      %s583 = int_to_ptr.vmem [resolvable:$true] %s582
      %s584 = sshll.u32 %s5, 4
      %s585 = int_to_ptr.hbm [resolvable:$true] %s584
      %587 = dma.vmem_to_hbm [thread:$0]  %s583, 64, %s585, [#allocation4]
    $region41: #{tpu_custom_call.1} parent=1 // pred_fallthru
      _
    // Predicated region
    $region42: #{tpu_custom_call.1} parent=1 // pred_check
      _
    $region43: #{tpu_custom_call.1} parent=1 // pred_check_branch
      %589 = sbr.rel (0) target = $region45
    $region44: #{tpu_custom_call.1} parent=1 // pred_region
      %591 = dma.done [#allocation4], 64
    $region45: #{tpu_custom_call.1} parent=1 // pred_fallthru
      _
    %592 = vsyncpa [#allocation3], 1
    %593 = vsyncpa [#allocation6], 1
    %594 = vsyncpa [#allocation9], 1
    %595 = vsyncpa [#allocation4], 1

</llo_original>
